<compile_context>
chip_gen: v6e
topology: v6e:2x2x1
jax: 0.10.0
libtpu: 0.0.40
codegen_flags: <defaults>
</compile_context>

<pallas_src>
import jax
import jax.numpy as jnp
from jax.experimental import pallas as pl
from jax.experimental.pallas import tpu as pltpu


def _log_softmax(logits):
    m = jnp.max(logits, axis=-1, keepdims=True)
    lse = m + jnp.log(jnp.sum(jnp.exp(logits - m), axis=-1, keepdims=True))
    return logits - lse


def copa_head_kernel(
    z_ref,     # (TB, z_dim)        f32, streamed per batch tile
    x_ref,     # (TB, dim)          f32, streamed per batch tile
    w1z_ref,   # (z_dim, hid_pad)   bf16, resident (EmbedNet folded into layer 1)
    w1x_ref,   # (dim, hid_pad)     bf16, resident
    b1_ref,    # (1, hid_pad)       f32,  resident (b1 + b_emb @ w1_emb, padded)
    w2_ref,    # (hid_pad, nb_Y)    bf16, resident (zero rows for the padding)
    b2_ref,    # (1, nb_Y)          f32,  resident
    wp_ref,    # (z_dim, nb_Y)      bf16, resident (prior net)
    bp_ref,    # (1, nb_Y)          f32,  resident
    out_ref,   # (TB, nb_Y)
):
    # In-kernel bf16 casts (VPU) -- avoids an extra host-side HBM pass.
    z_bf = z_ref[...].astype(jnp.bfloat16)
    x_bf = x_ref[...].astype(jnp.bfloat16)

    # Layer-1 pre-activations; hid padded to a 128-lane boundary host-side,
    # so this slab is exactly (TB, 128): no lane-unaligned slicing anywhere.
    h = jnp.dot(z_bf, w1z_ref[...], preferred_element_type=jnp.float32)
    h = h + jnp.dot(x_bf, w1x_ref[...], preferred_element_type=jnp.float32)
    h = jnp.maximum(h + b1_ref[...], 0.0)

    # Prior logits as their own small slab.
    prior = jnp.dot(z_bf, wp_ref[...], preferred_element_type=jnp.float32) + bp_ref[...]

    # Second (tiny) GEMM: bf16 operands, f32 accumulation.
    fused = jnp.dot(h.astype(jnp.bfloat16), w2_ref[...],
                    preferred_element_type=jnp.float32) + b2_ref[...]

    out_ref[...] = (_log_softmax(fused) + _log_softmax(prior)).astype(out_ref.dtype)


def _round_up(n, m):
    return (n + m - 1) // m * m


def copa_head_forward(x, z, params, *, batch_tile=4096, out_dtype=jnp.float32):
    """x: (B, dim) f32, z: (B, z_dim) f32 -> (B, nb_Y) log-probability sums."""
    B, dim = x.shape
    z_dim = z.shape[1]
    hid, nb_Y = params["w2"].shape
    hid_pad = _round_up(hid, 128)
    pad_h = hid_pad - hid

    # ---- host-side weight folding (done once; numerically exact padding) ----
    w1z = params["w_emb"] @ params["w1_emb"]                       # (z_dim, hid)
    b1f = params["b1"] + params["b_emb"] @ params["w1_emb"]        # (1, hid)
    w1z = jnp.pad(w1z, ((0, 0), (0, pad_h))).astype(jnp.bfloat16)  # (z_dim, hid_pad)
    w1x = jnp.pad(params["w1_x"], ((0, 0), (0, pad_h))).astype(jnp.bfloat16)
    b1f = jnp.pad(b1f, ((0, 0), (0, pad_h)))                       # f32
    w2p = jnp.pad(params["w2"], ((0, pad_h), (0, 0))).astype(jnp.bfloat16)
    wpr = params["w_prior"].astype(jnp.bfloat16)
    bpr = params["b_prior"]
    b2 = params["b2"]

    # ---- batch tiling (16-row aligned; VMEM budget safe for v7x's 64 MiB) ----
    b_aligned = _round_up(B, 16)
    # lane-padded per-row working set: double-buffered z/x/out + ~4 f32 temps
    per_row_vmem = 10 * 128 * 4                                    # ~5 KiB / row
    vmem_budget = 48 * 1024 * 1024
    tb_cap = max(16, (vmem_budget // per_row_vmem) // 16 * 16)

    tb = min(batch_tile, b_aligned, tb_cap)
    tb = _round_up(max(tb, 16), 16)
    if b_aligned > 32 and tb >= b_aligned:
        # keep >= 2 grid steps so the "parallel" axis can use both v7x TensorCores
        tb = _round_up(pl.cdiv(b_aligned, 2), 16)

    B_pad = _round_up(B, tb)
    if B_pad != B:
        x = jnp.pad(x, ((0, B_pad - B), (0, 0)))
        z = jnp.pad(z, ((0, B_pad - B), (0, 0)))

    grid = (B_pad // tb,)
    out_bytes = jnp.dtype(out_dtype).itemsize

    cost = pl.CostEstimate(
        flops=2 * B_pad * (z_dim * hid_pad + dim * hid_pad
                           + z_dim * nb_Y + hid_pad * nb_Y),
        transcendentals=2 * B_pad * (nb_Y + 1),        # exp + log for both softmaxes
        bytes_accessed=(B_pad * (dim + z_dim) * 4
                        + B_pad * nb_Y * out_bytes
                        + (w1z.size + w1x.size + w2p.size + wpr.size) * 2
                        + (b1f.size + b2.size + bpr.size) * 4),
    )

    out = pl.pallas_call(
        copa_head_kernel,
        out_shape=jax.ShapeDtypeStruct((B_pad, nb_Y), out_dtype),
        grid=grid,
        in_specs=[
            pl.BlockSpec((tb, z_dim), lambda i: (i, 0)),        # z: streamed
            pl.BlockSpec((tb, dim), lambda i: (i, 0)),          # x: streamed
            pl.BlockSpec((z_dim, hid_pad), lambda i: (0, 0)),   # w1z: resident
            pl.BlockSpec((dim, hid_pad), lambda i: (0, 0)),     # w1x: resident
            pl.BlockSpec((1, hid_pad), lambda i: (0, 0)),       # b1: resident
            pl.BlockSpec((hid_pad, nb_Y), lambda i: (0, 0)),    # w2: resident
            pl.BlockSpec((1, nb_Y), lambda i: (0, 0)),          # b2: resident
            pl.BlockSpec((z_dim, nb_Y), lambda i: (0, 0)),      # w_prior: resident
            pl.BlockSpec((1, nb_Y), lambda i: (0, 0)),          # b_prior: resident
        ],
        out_specs=pl.BlockSpec((tb, nb_Y), lambda i: (i, 0)),
        compiler_params=pltpu.CompilerParams(
            dimension_semantics=("parallel",),                  # dual-TC on v7x
            vmem_limit_bytes=vmem_budget,
        ),
        cost_estimate=cost,
    )(z, x, w1z, w1x, b1f, w2p, b2, wpr, bpr)

    return out[:B]


def init_params(key, dim, z_dim, emb_dim, hid, nb_Y):
    ks = jax.random.split(key, 10)

    def lin(k, fan_in, shape):
        return jax.random.normal(k, shape, jnp.float32) / jnp.sqrt(float(fan_in))

    return {
        "w_emb":   lin(ks[0], z_dim, (z_dim, emb_dim)),
        "b_emb":   jnp.zeros((1, emb_dim), jnp.float32),
        "w1_emb":  lin(ks[1], emb_dim + dim, (emb_dim, hid)),
        "w1_x":    lin(ks[2], emb_dim + dim, (dim, hid)),
        "b1":      jnp.zeros((1, hid), jnp.float32),
        "w2":      lin(ks[3], hid, (hid, nb_Y)),
        "b2":      jnp.zeros((1, nb_Y), jnp.float32),
        "w_prior": lin(ks[4], z_dim, (z_dim, nb_Y)),
        "b_prior": jnp.zeros((1, nb_Y), jnp.float32),
    }


if __name__ == "__main__":
    # small shapes consistent with the module
    B, dim, z_dim, emb_dim, hid, nb_Y = 8, 32, 4, 16, 100, 10

    key = jax.random.PRNGKey(0)
    kx, kz, kp = jax.random.split(key, 3)
    x = jax.random.normal(kx, (B, dim), jnp.float32)
    z = jax.random.normal(kz, (B, z_dim), jnp.float32)
    params = init_params(kp, dim, z_dim, emb_dim, hid, nb_Y)

    out = copa_head_forward(x, z, params)
    out = jax.block_until_ready(out)

    # --- sanity check 1: bf16-mirrored reference (matches kernel arithmetic) ---
    z_bf = z.astype(jnp.bfloat16)
    x_bf = x.astype(jnp.bfloat16)
    w1z_bf = (params["w_emb"] @ params["w1_emb"]).astype(jnp.bfloat16)
    w1x_bf = params["w1_x"].astype(jnp.bfloat16)
    b1f_ref = params["b1"] + params["b_emb"] @ params["w1_emb"]
    h_ref = jnp.maximum(
        jnp.dot(z_bf, w1z_bf, preferred_element_type=jnp.float32)
        + jnp.dot(x_bf, w1x_bf, preferred_element_type=jnp.float32)
        + b1f_ref, 0.0)
    fused_ref = (jnp.dot(h_ref.astype(jnp.bfloat16), params["w2"].astype(jnp.bfloat16),
                         preferred_element_type=jnp.float32) + params["b2"])
    prior_ref = (jnp.dot(z_bf, params["w_prior"].astype(jnp.bfloat16),
                         preferred_element_type=jnp.float32) + params["b_prior"])
    ref_bf16 = (jax.nn.log_softmax(fused_ref, axis=-1)
                + jax.nn.log_softmax(prior_ref, axis=-1))
    assert jnp.allclose(out, ref_bf16, atol=2e-3, rtol=2e-3), \
        "mismatch vs bf16-mirrored reference"

    # --- sanity check 2: pure-f32 reference of the original module (loose tol) ---
    emb = z @ params["w_emb"] + params["b_emb"]
    h_f32 = jnp.maximum(emb @ params["w1_emb"] + x @ params["w1_x"] + params["b1"], 0.0)
    fused_f32 = h_f32 @ params["w2"] + params["b2"]
    ref_f32 = (jax.nn.log_softmax(fused_f32, axis=-1)
               + jax.nn.log_softmax(z @ params["w_prior"] + params["b_prior"], axis=-1))
    assert jnp.allclose(out, ref_f32, atol=5e-2, rtol=5e-2), \
        "mismatch vs f32 module reference"

    print("KERNEL_OK")
</pallas_src>

<mosaic_0001>
module attributes {stable_mosaic.version = 11 : i64} {
  func.func @copa_head_kernel(%arg0: i32, %arg1: memref<16x4xf32, #tpu.memory_space<vmem>>, %arg2: memref<16x32xf32, #tpu.memory_space<vmem>>, %arg3: memref<4x128xbf16, #tpu.memory_space<vmem>>, %arg4: memref<32x128xbf16, #tpu.memory_space<vmem>>, %arg5: memref<1x128xf32, #tpu.memory_space<vmem>>, %arg6: memref<128x10xbf16, #tpu.memory_space<vmem>>, %arg7: memref<1x10xf32, #tpu.memory_space<vmem>>, %arg8: memref<4x10xbf16, #tpu.memory_space<vmem>>, %arg9: memref<1x10xf32, #tpu.memory_space<vmem>>, %arg10: memref<16x10xf32, #tpu.memory_space<vmem>>) attributes {dimension_semantics = [#tpu.dimension_semantics<parallel>], iteration_bounds = array<i64: 1>, scalar_prefetch = 0 : i64, scratch_operands = 0 : i64, tpu.core_type = #tpu.core_type<tc>, window_params = [{transform_indices = @transform_0, window_bounds = array<i64: 16, 4>}, {transform_indices = @transform_1, window_bounds = array<i64: 16, 32>}, {pipeline_mode = #tpu.pipeline_mode<synchronous>, transform_indices = @transform_2, window_bounds = array<i64: 4, 128>}, {pipeline_mode = #tpu.pipeline_mode<synchronous>, transform_indices = @transform_3, window_bounds = array<i64: 32, 128>}, {pipeline_mode = #tpu.pipeline_mode<synchronous>, transform_indices = @transform_4, window_bounds = array<i64: 1, 128>}, {pipeline_mode = #tpu.pipeline_mode<synchronous>, transform_indices = @transform_5, window_bounds = array<i64: 128, 10>}, {pipeline_mode = #tpu.pipeline_mode<synchronous>, transform_indices = @transform_6, window_bounds = array<i64: 1, 10>}, {pipeline_mode = #tpu.pipeline_mode<synchronous>, transform_indices = @transform_7, window_bounds = array<i64: 4, 10>}, {pipeline_mode = #tpu.pipeline_mode<synchronous>, transform_indices = @transform_8, window_bounds = array<i64: 1, 10>}, {transform_indices = @transform_9, window_bounds = array<i64: 16, 10>}]} {
    %c0 = arith.constant 0 : index
    %c0_0 = arith.constant 0 : index
    %0 = vector.load %arg1[%c0, %c0_0] : memref<16x4xf32, #tpu.memory_space<vmem>>, vector<16x4xf32>
    %1 = arith.truncf %0 : vector<16x4xf32> to vector<16x4xbf16>
    %c0_1 = arith.constant 0 : index
    %c0_2 = arith.constant 0 : index
    %2 = vector.load %arg2[%c0_1, %c0_2] : memref<16x32xf32, #tpu.memory_space<vmem>>, vector<16x32xf32>
    %3 = arith.truncf %2 : vector<16x32xf32> to vector<16x32xbf16>
    %c0_3 = arith.constant 0 : index
    %c0_4 = arith.constant 0 : index
    %4 = vector.load %arg3[%c0_3, %c0_4] : memref<4x128xbf16, #tpu.memory_space<vmem>>, vector<4x128xbf16>
    %cst = arith.constant dense<0.000000e+00> : vector<16x128xf32>
    %5 = tpu.matmul %1, %4, %cst {dimension_numbers = #tpu.dot_dimension_numbers<[1], [0], [0], [1], [0, 0, 1, 1], [], []>} : vector<16x4xbf16>, vector<4x128xbf16>, vector<16x128xf32> -> vector<16x128xf32>
    %c0_5 = arith.constant 0 : index
    %c0_6 = arith.constant 0 : index
    %6 = vector.load %arg4[%c0_5, %c0_6] : memref<32x128xbf16, #tpu.memory_space<vmem>>, vector<32x128xbf16>
    %cst_7 = arith.constant dense<0.000000e+00> : vector<16x128xf32>
    %7 = tpu.matmul %3, %6, %cst_7 {dimension_numbers = #tpu.dot_dimension_numbers<[1], [0], [0], [1], [0, 0, 1, 1], [], []>} : vector<16x32xbf16>, vector<32x128xbf16>, vector<16x128xf32> -> vector<16x128xf32>
    %8 = arith.addf %5, %7 : vector<16x128xf32>
    %c0_8 = arith.constant 0 : index
    %c0_9 = arith.constant 0 : index
    %9 = vector.load %arg5[%c0_8, %c0_9] : memref<1x128xf32, #tpu.memory_space<vmem>>, vector<1x128xf32>
    %10 = vector.broadcast %9 : vector<1x128xf32> to vector<16x128xf32>
    %11 = arith.addf %8, %10 : vector<16x128xf32>
    %cst_10 = arith.constant 0.000000e+00 : f32
    %12 = vector.broadcast %cst_10 : f32 to vector<16x128xf32>
    %13 = arith.maximumf %11, %12 : vector<16x128xf32>
    %c0_11 = arith.constant 0 : index
    %c0_12 = arith.constant 0 : index
    %14 = vector.load %arg8[%c0_11, %c0_12] : memref<4x10xbf16, #tpu.memory_space<vmem>>, vector<4x10xbf16>
    %cst_13 = arith.constant dense<0.000000e+00> : vector<16x10xf32>
    %15 = tpu.matmul %1, %14, %cst_13 {dimension_numbers = #tpu.dot_dimension_numbers<[1], [0], [0], [1], [0, 0, 1, 1], [], []>} : vector<16x4xbf16>, vector<4x10xbf16>, vector<16x10xf32> -> vector<16x10xf32>
    %c0_14 = arith.constant 0 : index
    %c0_15 = arith.constant 0 : index
    %16 = vector.load %arg9[%c0_14, %c0_15] : memref<1x10xf32, #tpu.memory_space<vmem>>, vector<1x10xf32>
    %17 = vector.broadcast %16 : vector<1x10xf32> to vector<16x10xf32>
    %18 = arith.addf %15, %17 : vector<16x10xf32>
    %19 = arith.truncf %13 : vector<16x128xf32> to vector<16x128xbf16>
    %c0_16 = arith.constant 0 : index
    %c0_17 = arith.constant 0 : index
    %20 = vector.load %arg6[%c0_16, %c0_17] : memref<128x10xbf16, #tpu.memory_space<vmem>>, vector<128x10xbf16>
    %cst_18 = arith.constant dense<0.000000e+00> : vector<16x10xf32>
    %21 = tpu.matmul %19, %20, %cst_18 {dimension_numbers = #tpu.dot_dimension_numbers<[1], [0], [0], [1], [0, 0, 1, 1], [], []>} : vector<16x128xbf16>, vector<128x10xbf16>, vector<16x10xf32> -> vector<16x10xf32>
    %c0_19 = arith.constant 0 : index
    %c0_20 = arith.constant 0 : index
    %22 = vector.load %arg7[%c0_19, %c0_20] : memref<1x10xf32, #tpu.memory_space<vmem>>, vector<1x10xf32>
    %23 = vector.broadcast %22 : vector<1x10xf32> to vector<16x10xf32>
    %24 = arith.addf %21, %23 : vector<16x10xf32>
    %cst_21 = arith.constant dense<0xFF800000> : vector<16xf32>
    %25 = vector.multi_reduction <maximumf>, %24, %cst_21 [1] : vector<16x10xf32> to vector<16xf32>
    %26 = vector.shape_cast %25 : vector<16xf32> to vector<16x1xf32>
    %27 = vector.broadcast %26 : vector<16x1xf32> to vector<16x10xf32>
    %28 = arith.subf %24, %27 : vector<16x10xf32>
    %29 = math.exp %28 : vector<16x10xf32>
    %cst_22 = arith.constant dense<0.000000e+00> : vector<16xf32>
    %30 = vector.multi_reduction <add>, %29, %cst_22 [1] : vector<16x10xf32> to vector<16xf32>
    %31 = vector.shape_cast %30 : vector<16xf32> to vector<16x1xf32>
    %32 = math.log %31 : vector<16x1xf32>
    %33 = arith.addf %26, %32 : vector<16x1xf32>
    %34 = vector.broadcast %33 : vector<16x1xf32> to vector<16x10xf32>
    %35 = arith.subf %24, %34 : vector<16x10xf32>
    %cst_23 = arith.constant dense<0xFF800000> : vector<16xf32>
    %36 = vector.multi_reduction <maximumf>, %18, %cst_23 [1] : vector<16x10xf32> to vector<16xf32>
    %37 = vector.shape_cast %36 : vector<16xf32> to vector<16x1xf32>
    %38 = vector.broadcast %37 : vector<16x1xf32> to vector<16x10xf32>
    %39 = arith.subf %18, %38 : vector<16x10xf32>
    %40 = math.exp %39 : vector<16x10xf32>
    %cst_24 = arith.constant dense<0.000000e+00> : vector<16xf32>
    %41 = vector.multi_reduction <add>, %40, %cst_24 [1] : vector<16x10xf32> to vector<16xf32>
    %42 = vector.shape_cast %41 : vector<16xf32> to vector<16x1xf32>
    %43 = math.log %42 : vector<16x1xf32>
    %44 = arith.addf %37, %43 : vector<16x1xf32>
    %45 = vector.broadcast %44 : vector<16x1xf32> to vector<16x10xf32>
    %46 = arith.subf %18, %45 : vector<16x10xf32>
    %47 = arith.addf %35, %46 : vector<16x10xf32>
    %c0_25 = arith.constant 0 : index
    %c0_26 = arith.constant 0 : index
    %48 = vector.load %arg10[%c0_25, %c0_26] : memref<16x10xf32, #tpu.memory_space<vmem>>, vector<16x10xf32>
    tpu.vector_store %arg10[%c0_25, %c0_26], %47 {strides = array<i32>} : memref<16x10xf32, #tpu.memory_space<vmem>>, vector<16x10xf32>,
    return
  }
  func.func @transform_0(%arg0: i32) -> (i32, i32) {
    %c0_i32 = arith.constant 0 : i32
    %c0_i32_0 = arith.constant 0 : i32
    return %arg0, %c0_i32 : i32, i32
  }
  func.func @transform_1(%arg0: i32) -> (i32, i32) {
    %c0_i32 = arith.constant 0 : i32
    %c0_i32_0 = arith.constant 0 : i32
    return %arg0, %c0_i32 : i32, i32
  }
  func.func @transform_2(%arg0: i32) -> (i32, i32) {
    %c0_i32 = arith.constant 0 : i32
    %c0_i32_0 = arith.constant 0 : i32
    %c0_i32_1 = arith.constant 0 : i32
    return %c0_i32, %c0_i32_0 : i32, i32
  }
  func.func @transform_3(%arg0: i32) -> (i32, i32) {
    %c0_i32 = arith.constant 0 : i32
    %c0_i32_0 = arith.constant 0 : i32
    %c0_i32_1 = arith.constant 0 : i32
    return %c0_i32, %c0_i32_0 : i32, i32
  }
  func.func @transform_4(%arg0: i32) -> (i32, i32) {
    %c0_i32 = arith.constant 0 : i32
    %c0_i32_0 = arith.constant 0 : i32
    %c0_i32_1 = arith.constant 0 : i32
    return %c0_i32, %c0_i32_0 : i32, i32
  }
  func.func @transform_5(%arg0: i32) -> (i32, i32) {
    %c0_i32 = arith.constant 0 : i32
    %c0_i32_0 = arith.constant 0 : i32
    %c0_i32_1 = arith.constant 0 : i32
    return %c0_i32, %c0_i32_0 : i32, i32
  }
  func.func @transform_6(%arg0: i32) -> (i32, i32) {
    %c0_i32 = arith.constant 0 : i32
    %c0_i32_0 = arith.constant 0 : i32
    %c0_i32_1 = arith.constant 0 : i32
    return %c0_i32, %c0_i32_0 : i32, i32
  }
  func.func @transform_7(%arg0: i32) -> (i32, i32) {
    %c0_i32 = arith.constant 0 : i32
    %c0_i32_0 = arith.constant 0 : i32
    %c0_i32_1 = arith.constant 0 : i32
    return %c0_i32, %c0_i32_0 : i32, i32
  }
  func.func @transform_8(%arg0: i32) -> (i32, i32) {
    %c0_i32 = arith.constant 0 : i32
    %c0_i32_0 = arith.constant 0 : i32
    %c0_i32_1 = arith.constant 0 : i32
    return %c0_i32, %c0_i32_0 : i32, i32
  }
  func.func @transform_9(%arg0: i32) -> (i32, i32) {
    %c0_i32 = arith.constant 0 : i32
    %c0_i32_0 = arith.constant 0 : i32
    return %arg0, %c0_i32 : i32, i32
  }
}

</mosaic_0001>

<llo_original>
// kernel: tpu_custom_call.1
$region0: #{tpu_custom_call.1}
  #allocation0 [shape = 'u32[]', space=smem, size = 0x4, offset = 0x4, fixed_abs, tag = 'smem constant byte address 0x4 - core index']
  #allocation1 [shape = 'u32[144,128]{1,0:T(1,128)}', space=vmem, size = 0x12000, scoped, tag = 'internal scratch']
  %s0 = inlined_call_operand.vmem [shape: f32[16,4], index: 0, kind: input, shape index: {}]
  %s1 = inlined_call_operand.vmem [shape: f32[16,32], index: 1, kind: input, shape index: {}]
  %s2 = inlined_call_operand.vmem [shape: bf16[4,128], index: 2, kind: input, shape index: {}]
  %s3 = inlined_call_operand.vmem [shape: bf16[32,128], index: 3, kind: input, shape index: {}]
  %s4 = inlined_call_operand.vmem [shape: f32[1,128], index: 4, kind: input, shape index: {}]
  %s5 = inlined_call_operand.vmem [shape: bf16[128,10], index: 5, kind: input, shape index: {}]
  %s6 = inlined_call_operand.vmem [shape: f32[1,10], index: 6, kind: input, shape index: {}]
  %s7 = inlined_call_operand.vmem [shape: bf16[4,10], index: 7, kind: input, shape index: {}]
  %s8 = inlined_call_operand.vmem [shape: f32[1,10], index: 8, kind: input, shape index: {}]
  %s9 = inlined_call_operand.hbm [shape: f32[16,10], index: 9, kind: output, shape index: {}]
  %s10 = sld [smem:[#allocation0]]
  $region46: #{tpu_custom_call.1} parent=0
    _
  %s12 = ssub.s32 1, %s10
  %s13 = scalar_select 0, %s12, %s10
  $region1: #{tpu_custom_call.1} parent=0
    #allocation2 [shape = 'u8[8192]{0}', space=vmem, size = 0x2000, scoped, tag = 'output window, operand 0, single buffered']
    #allocation3 [shape = 's32[1]{0}', space=sflag, size = 0x4, scoped, tag = 'scoped memory for tpu_custom_call.1']
    %14 = vsyncpa [#allocation3], 0
    // Predicated region
    $region2: #{tpu_custom_call.1} parent=1 // pred_check
      _
    $region3: #{tpu_custom_call.1} parent=1 // pred_check_branch
      %16 = sbr.rel (0) target = $region5
    $region4: #{tpu_custom_call.1} parent=1 // pred_region
      _
    $region5: #{tpu_custom_call.1} parent=1 // pred_fallthru
      _
    // Predicated region
    $region6: #{tpu_custom_call.1} parent=1 // pred_check
      _
    $region7: #{tpu_custom_call.1} parent=1 // pred_check_branch
      %18 = sbr.rel (0) target = $region9
    $region8: #{tpu_custom_call.1} parent=1 // pred_region
      _
    $region9: #{tpu_custom_call.1} parent=1 // pred_fallthru
      _
    // Predicated region
    $region10: #{tpu_custom_call.1} parent=1 // pred_check
      _
    $region11: #{tpu_custom_call.1} parent=1 // pred_check_branch
      %20 = sbr.rel (0) target = $region13
    $region12: #{tpu_custom_call.1} parent=1 // pred_region
      _
    $region13: #{tpu_custom_call.1} parent=1 // pred_fallthru
      _
    // Predicated region
    $region14: #{tpu_custom_call.1} parent=1 // pred_check
      _
    $region15: #{tpu_custom_call.1} parent=1 // pred_check_branch
      %22 = sbr.rel (0) target = $region17
    $region16: #{tpu_custom_call.1} parent=1 // pred_region
      _
    $region17: #{tpu_custom_call.1} parent=1 // pred_fallthru
      _
    // Predicated region
    $region18: #{tpu_custom_call.1} parent=1 // pred_check
      _
    $region19: #{tpu_custom_call.1} parent=1 // pred_check_branch
      %24 = sbr.rel (0) target = $region21
    $region20: #{tpu_custom_call.1} parent=1 // pred_region
      _
    $region21: #{tpu_custom_call.1} parent=1 // pred_fallthru
      _
    // Predicated region
    $region22: #{tpu_custom_call.1} parent=1 // pred_check
      _
    $region23: #{tpu_custom_call.1} parent=1 // pred_check_branch
      %26 = sbr.rel (0) target = $region25
    $region24: #{tpu_custom_call.1} parent=1 // pred_region
      _
    $region25: #{tpu_custom_call.1} parent=1 // pred_fallthru
      _
    // Predicated region
    $region26: #{tpu_custom_call.1} parent=1 // pred_check
      _
    $region27: #{tpu_custom_call.1} parent=1 // pred_check_branch
      %28 = sbr.rel (0) target = $region29
    $region28: #{tpu_custom_call.1} parent=1 // pred_region
      _
    $region29: #{tpu_custom_call.1} parent=1 // pred_fallthru
      _
    // Predicated region
    $region30: #{tpu_custom_call.1} parent=1 // pred_check
      _
    $region31: #{tpu_custom_call.1} parent=1 // pred_check_branch
      %30 = sbr.rel (0) target = $region33
    $region32: #{tpu_custom_call.1} parent=1 // pred_region
      _
    $region33: #{tpu_custom_call.1} parent=1 // pred_fallthru
      _
    // Predicated region
    $region34: #{tpu_custom_call.1} parent=1 // pred_check
      _
    $region35: #{tpu_custom_call.1} parent=1 // pred_check_branch
      %32 = sbr.rel (0) target = $region37
    $region36: #{tpu_custom_call.1} parent=1 // pred_region
      _
    $region37: #{tpu_custom_call.1} parent=1 // pred_fallthru
      _
    %v34 = vld [vmem:[%s0] sm:$0xff]
    %v35 = vld [vmem:[%s0 + $0x8] sm:$0xff]
    %v36 = vpack.c.bf16 %v35, %v34
    %v37 = vld [vmem:[%s1] sm:$0xff]
    %v38 = vld [vmem:[%s1 + $0x8] sm:$0xff]
    %v39 = vpack.c.bf16 %v38, %v37
    %v40 = vld [vmem:[%s2] sm:$0x3]
    %v41 = vld [vmem:[%s3] sm:$0xf]
    %v42 = vld [vmem:[%s3 + $0x4] sm:$0xf]
    %v43 = vld [vmem:[%s3 + $0x8] sm:$0xf]
    %v44 = vld [vmem:[%s3 + $0xc] sm:$0xf]
    %v49 = vunpack.c.l.b16 %v41
    %v50 = vunpack.c.l.b16 %v42
    %v51 = vunpack.c.l.b16 %v43
    %v52 = vunpack.c.l.b16 %v44
    %v53 = vpack.c.b16 %v50, %v49
    %v54 = vpack.c.b16 %v52, %v51
    %vm57 = vcmask 261120
    %v59 = vsel %vm57, %v39, 0
    %61 = vmatprep.subr.bf16.mxu0 0
    %62 = vmatpush1.bf16.msra.mxu0 0
    %63 = vmatprep.subr.bf16.mxu0 0
    %64 = vmatpush1.bf16.msra.mxu0 0
    %65 = vmatprep.subr.bf16.mxu0 0
    %66 = vmatpush1.bf16.msra.mxu0 0
    %67 = vmatprep.subr.bf16.mxu0 0
    %68 = vmatpush1.bf16.msra.mxu0 0
    %69 = vmatprep.subr.bf16.mxu0 0
    %70 = vmatpush1.bf16.msra.mxu0 0
    %71 = vmatprep.subr.bf16.mxu0 0
    %72 = vmatpush1.bf16.msra.mxu0 0
    %73 = vmatprep.subr.bf16.mxu0 0
    %74 = vmatpush1.bf16.msra.mxu0 %v54
    %75 = vmatprep.subr.bf16.mxu0 0
    %76 = vmatpush1.bf16.msra.mxu0 %v53
    %77 = vmatprep.subr.bf16.mxu0 0
    %78 = vmatpush2.bf16.msra.mxu0 0
    %79 = vmatprep.subr.bf16.mxu0 0
    %80 = vmatpush2.bf16.msra.mxu0 0
    %81 = vmatprep.subr.bf16.mxu0 0
    %82 = vmatpush2.bf16.msra.mxu0 0
    %83 = vmatprep.subr.bf16.mxu0 0
    %84 = vmatpush2.bf16.msra.mxu0 0
    %85 = vmatprep.subr.bf16.mxu0 0
    %86 = vmatpush2.bf16.msra.mxu0 0
    %87 = vmatprep.subr.bf16.mxu0 0
    %88 = vmatpush2.bf16.msra.mxu0 0
    %89 = vmatprep.subr.bf16.mxu0 0
    %90 = vmatpush2.bf16.msra.mxu0 0
    %91 = vmatprep.subr.bf16.mxu0 0
    %92 = vmatpush2.bf16.msra.mxu0 0
    %93 = vmatprep.mubr.bf16.mxu0 0
    %94 = vmatmul.mubr.bf16.gmra.mxu0 %v59
    %v95 = vpop.f32.mrf.mxu0
    %v96 = vadd.f32 0.0, %v95
    %v97 = vpop.f32.mrf.mxu0
    %v98 = vpop.f32.mrf.mxu0
    %v99 = vadd.f32 0.0, %v98
    %v100 = vpop.f32.mrf.mxu0
    %101 = vdwg.mxu0
    %vm102 = vcmask 31744
    %v104 = vsel %vm102, %v36, 0
    %vm106 = vcmask 1041408
    %v108 = vsel %vm106, %v40, 0
    %110 = vmatprep.subr.bf16.mxu0 0
    %111 = vmatpush1.bf16.msra.mxu0 0
    %112 = vmatprep.subr.bf16.mxu0 0
    %113 = vmatpush1.bf16.msra.mxu0 0
    %114 = vmatprep.subr.bf16.mxu0 0
    %115 = vmatpush1.bf16.msra.mxu0 0
    %116 = vmatprep.subr.bf16.mxu0 0
    %117 = vmatpush1.bf16.msra.mxu0 0
    %118 = vmatprep.subr.bf16.mxu0 0
    %119 = vmatpush1.bf16.msra.mxu0 0
    %120 = vmatprep.subr.bf16.mxu0 0
    %121 = vmatpush1.bf16.msra.mxu0 0
    %122 = vmatprep.subr.bf16.mxu0 0
    %123 = vmatpush1.bf16.msra.mxu0 0
    %124 = vmatprep.subr.bf16.mxu0 0
    %125 = vmatpush1.bf16.msra.mxu0 %v108
    %126 = vmatprep.subr.bf16.mxu0 0
    %127 = vmatpush2.bf16.msra.mxu0 0
    %128 = vmatprep.subr.bf16.mxu0 0
    %129 = vmatpush2.bf16.msra.mxu0 0
    %130 = vmatprep.subr.bf16.mxu0 0
    %131 = vmatpush2.bf16.msra.mxu0 0
    %132 = vmatprep.subr.bf16.mxu0 0
    %133 = vmatpush2.bf16.msra.mxu0 0
    %134 = vmatprep.subr.bf16.mxu0 0
    %135 = vmatpush2.bf16.msra.mxu0 0
    %136 = vmatprep.subr.bf16.mxu0 0
    %137 = vmatpush2.bf16.msra.mxu0 0
    %138 = vmatprep.subr.bf16.mxu0 0
    %139 = vmatpush2.bf16.msra.mxu0 0
    %140 = vmatprep.subr.bf16.mxu0 0
    %141 = vmatpush2.bf16.msra.mxu0 0
    %142 = vmatprep.mubr.bf16.mxu0 0
    %143 = vmatmul.mubr.bf16.gmra.mxu0 %v104
    %v144 = vpop.f32.mrf.mxu0
    %v145 = vadd.f32 %v96, %v144
    %v146 = vpop.f32.mrf.mxu0
    %v147 = vpop.f32.mrf.mxu0
    %v148 = vadd.f32 %v99, %v147
    %v149 = vpop.f32.mrf.mxu0
    %150 = vdwg.mxu0
    %v151 = vld [vmem:[%s4] sm:$0x1]
    %v153 = vlaneseq
    %v154 = vshrl.u32 %v153, 7
    %v155 = vsub.s32 0, %v154
    %v156 = vrot.slane %v151, %v155
    %v158 = vadd.f32 %v145, %v156
    %v159 = vadd.f32 %v148, %v156
    %v160 = vmax.f32 %v158, 0.0
    %v161 = vmax.f32 %v159, 0.0
    %v162 = vld [vmem:[%s7] sm:$0x3]
    %v163 = vld [vmem:[%s8] sm:$0x1]
    %v165 = vlaneseq
    %v166 = vshrl.u32 %v165, 7
    %v167 = vsub.s32 0, %v166
    %v168 = vrot.slane %v163, %v167
    %v171 = vsel %vm106, %v162, 0
    %173 = vmatprep.subr.bf16.mxu0 0
    %174 = vmatpush1.bf16.msra.mxu0 0
    %175 = vmatprep.subr.bf16.mxu0 0
    %176 = vmatpush1.bf16.msra.mxu0 0
    %177 = vmatprep.subr.bf16.mxu0 0
    %178 = vmatpush1.bf16.msra.mxu0 0
    %179 = vmatprep.subr.bf16.mxu0 0
    %180 = vmatpush1.bf16.msra.mxu0 0
    %181 = vmatprep.subr.bf16.mxu0 0
    %182 = vmatpush1.bf16.msra.mxu0 0
    %183 = vmatprep.subr.bf16.mxu0 0
    %184 = vmatpush1.bf16.msra.mxu0 0
    %185 = vmatprep.subr.bf16.mxu0 0
    %186 = vmatpush1.bf16.msra.mxu0 0
    %187 = vmatprep.subr.bf16.mxu0 0
    %188 = vmatpush1.bf16.msra.mxu0 %v171
    %189 = vmatprep.subr.bf16.mxu0 0
    %190 = vmatpush2.bf16.msra.mxu0 0
    %191 = vmatprep.subr.bf16.mxu0 0
    %192 = vmatpush2.bf16.msra.mxu0 0
    %193 = vmatprep.subr.bf16.mxu0 0
    %194 = vmatpush2.bf16.msra.mxu0 0
    %195 = vmatprep.subr.bf16.mxu0 0
    %196 = vmatpush2.bf16.msra.mxu0 0
    %197 = vmatprep.subr.bf16.mxu0 0
    %198 = vmatpush2.bf16.msra.mxu0 0
    %199 = vmatprep.subr.bf16.mxu0 0
    %200 = vmatpush2.bf16.msra.mxu0 0
    %201 = vmatprep.subr.bf16.mxu0 0
    %202 = vmatpush2.bf16.msra.mxu0 0
    %203 = vmatprep.subr.bf16.mxu0 0
    %204 = vmatpush2.bf16.msra.mxu0 0
    %205 = vmatprep.mubr.bf16.mxu0 0
    %206 = vmatmul.mubr.bf16.gmra.mxu0 %v104
    %v207 = vpop.f32.mrf.mxu0
    %v208 = vadd.f32 %v168, %v207
    %v209 = vpop.f32.mrf.mxu0
    %v210 = vpop.f32.mrf.mxu0
    %v211 = vadd.f32 %v168, %v210
    %v212 = vpop.f32.mrf.mxu0
    %213 = vdwg.mxu0
    %v214 = vpack.c.bf16 %v161, %v160
    %v215 = vld [vmem:[%s5] sm:$0xf]
    %v216 = vld [vmem:[%s5 + $0x4] sm:$0xf]
    %v217 = vld [vmem:[%s5 + $0x8] sm:$0xf]
    %v218 = vld [vmem:[%s5 + $0xc] sm:$0xf]
    %v219 = vld [vmem:[%s5 + $0x10] sm:$0xf]
    %v220 = vld [vmem:[%s5 + $0x14] sm:$0xf]
    %v221 = vld [vmem:[%s5 + $0x18] sm:$0xf]
    %v222 = vld [vmem:[%s5 + $0x1c] sm:$0xf]
    %v223 = vld [vmem:[%s5 + $0x20] sm:$0xf]
    %v224 = vld [vmem:[%s5 + $0x24] sm:$0xf]
    %v225 = vld [vmem:[%s5 + $0x28] sm:$0xf]
    %v226 = vld [vmem:[%s5 + $0x2c] sm:$0xf]
    %v227 = vld [vmem:[%s5 + $0x30] sm:$0xf]
    %v228 = vld [vmem:[%s5 + $0x34] sm:$0xf]
    %v229 = vld [vmem:[%s5 + $0x38] sm:$0xf]
    %v230 = vld [vmem:[%s5 + $0x3c] sm:$0xf]
    %v231 = vld [vmem:[%s6] sm:$0x1]
    %v233 = vlaneseq
    %v234 = vshrl.u32 %v233, 7
    %v235 = vsub.s32 0, %v234
    %v236 = vrot.slane %v231, %v235
    %v254 = vunpack.c.l.b16 %v215
    %v255 = vunpack.c.l.b16 %v216
    %v256 = vunpack.c.l.b16 %v217
    %v257 = vunpack.c.l.b16 %v218
    %v258 = vunpack.c.l.b16 %v219
    %v259 = vunpack.c.l.b16 %v220
    %v260 = vunpack.c.l.b16 %v221
    %v261 = vunpack.c.l.b16 %v222
    %v262 = vunpack.c.l.b16 %v223
    %v263 = vunpack.c.l.b16 %v224
    %v264 = vunpack.c.l.b16 %v225
    %v265 = vunpack.c.l.b16 %v226
    %v266 = vunpack.c.l.b16 %v227
    %v267 = vunpack.c.l.b16 %v228
    %v268 = vunpack.c.l.b16 %v229
    %v269 = vunpack.c.l.b16 %v230
    %v270 = vpack.c.b16 %v255, %v254
    %v271 = vpack.c.b16 %v257, %v256
    %v272 = vpack.c.b16 %v259, %v258
    %v273 = vpack.c.b16 %v261, %v260
    %v274 = vpack.c.b16 %v263, %v262
    %v275 = vpack.c.b16 %v265, %v264
    %v276 = vpack.c.b16 %v267, %v266
    %v277 = vpack.c.b16 %v269, %v268
    %286 = vmatprep.subr.bf16.mxu0 0
    %287 = vmatpush1.bf16.msra.mxu0 %v277
    %288 = vmatprep.subr.bf16.mxu0 0
    %289 = vmatpush1.bf16.msra.mxu0 %v276
    %290 = vmatprep.subr.bf16.mxu0 0
    %291 = vmatpush1.bf16.msra.mxu0 %v275
    %292 = vmatprep.subr.bf16.mxu0 0
    %293 = vmatpush1.bf16.msra.mxu0 %v274
    %294 = vmatprep.subr.bf16.mxu0 0
    %295 = vmatpush1.bf16.msra.mxu0 %v273
    %296 = vmatprep.subr.bf16.mxu0 0
    %297 = vmatpush1.bf16.msra.mxu0 %v272
    %298 = vmatprep.subr.bf16.mxu0 0
    %299 = vmatpush1.bf16.msra.mxu0 %v271
    %300 = vmatprep.subr.bf16.mxu0 0
    %301 = vmatpush1.bf16.msra.mxu0 %v270
    %302 = vmatprep.subr.bf16.mxu0 0
    %303 = vmatpush2.bf16.msra.mxu0 0
    %304 = vmatprep.subr.bf16.mxu0 0
    %305 = vmatpush2.bf16.msra.mxu0 0
    %306 = vmatprep.subr.bf16.mxu0 0
    %307 = vmatpush2.bf16.msra.mxu0 0
    %308 = vmatprep.subr.bf16.mxu0 0
    %309 = vmatpush2.bf16.msra.mxu0 0
    %310 = vmatprep.subr.bf16.mxu0 0
    %311 = vmatpush2.bf16.msra.mxu0 0
    %312 = vmatprep.subr.bf16.mxu0 0
    %313 = vmatpush2.bf16.msra.mxu0 0
    %314 = vmatprep.subr.bf16.mxu0 0
    %315 = vmatpush2.bf16.msra.mxu0 0
    %316 = vmatprep.subr.bf16.mxu0 0
    %317 = vmatpush2.bf16.msra.mxu0 0
    %318 = vmatprep.mubr.bf16.mxu0 0
    %319 = vmatmul.mubr.bf16.gmra.mxu0 %v214
    %v320 = vpop.f32.mrf.mxu0
    %v321 = vadd.f32 %v236, %v320
    %v322 = vpop.f32.mrf.mxu0
    %v323 = vpop.f32.mrf.mxu0
    %v324 = vadd.f32 %v236, %v323
    %v325 = vpop.f32.mrf.mxu0
    %326 = vdwg.mxu0
    %vm327 = vcmask 80896
    %v328 = vsel %vm327, %v321, -inf
    %329 = vmax.xlane.f32.xlu0 %v328
    %v330 = vpop.xlane.xlu0 %329
    %v331 = vsel %vm327, %v324, -inf
    %332 = vmax.xlane.f32.xlu0 %v331
    %v333 = vpop.xlane.xlu0 %332
    %v334 = vsub.f32 %v321, %v330
    %v335 = vsub.f32 %v324, %v333
    %v336 = vmul.f32 %v334, 1.442695
    %v337 = vpow.pop %v336
    %v338 = vmul.f32 %v335, 1.442695
    %v339 = vpow.pop %v338
    %v340 = vsel %vm327, %v337, 0.0
    %341 = vadd.xlane.f32.xlu0 %v340
    %v342 = vpop.xlane.xlu0 %341
    %v343 = vsel %vm327, %v339, 0.0
    %344 = vadd.xlane.f32.xlu0 %v343
    %v345 = vpop.xlane.xlu0 %344
    %v346 = vlog2.pop %v342
    %v347 = vmul.f32 %v346, 0.6931472
    %v348 = vlog2.pop %v345
    %v349 = vmul.f32 %v348, 0.6931472
    %v350 = vadd.f32 %v330, %v347
    %v351 = vadd.f32 %v333, %v349
    %v352 = vsub.f32 %v321, %v350
    %v353 = vsub.f32 %v324, %v351
    %v354 = vsel %vm327, %v208, -inf
    %355 = vmax.xlane.f32.xlu0 %v354
    %v356 = vpop.xlane.xlu0 %355
    %v357 = vsel %vm327, %v211, -inf
    %358 = vmax.xlane.f32.xlu0 %v357
    %v359 = vpop.xlane.xlu0 %358
    %v360 = vsub.f32 %v208, %v356
    %v361 = vsub.f32 %v211, %v359
    %v362 = vmul.f32 %v360, 1.442695
    %v363 = vpow.pop %v362
    %v364 = vmul.f32 %v361, 1.442695
    %v365 = vpow.pop %v364
    %v366 = vsel %vm327, %v363, 0.0
    %367 = vadd.xlane.f32.xlu0 %v366
    %v368 = vpop.xlane.xlu0 %367
    %v369 = vsel %vm327, %v365, 0.0
    %370 = vadd.xlane.f32.xlu0 %v369
    %v371 = vpop.xlane.xlu0 %370
    %v372 = vlog2.pop %v368
    %v373 = vmul.f32 %v372, 0.6931472
    %v374 = vlog2.pop %v371
    %v375 = vmul.f32 %v374, 0.6931472
    %v376 = vadd.f32 %v356, %v373
    %v377 = vadd.f32 %v359, %v375
    %v378 = vsub.f32 %v208, %v376
    %v379 = vsub.f32 %v211, %v377
    %v380 = vadd.f32 %v352, %v378
    %v381 = vadd.f32 %v353, %v379
    %382 = vst.msk [vmem:[#allocation2] sm:$0xff] %vm327, %v380
    %383 = vst.msk [vmem:[#allocation2 + $0x8] sm:$0xff] %vm327, %v381
    // Predicated region
    $region38: #{tpu_custom_call.1} parent=1 // pred_check
      _
    $region39: #{tpu_custom_call.1} parent=1 // pred_check_branch
      %385 = sbr.rel (0) target = $region41
    $region40: #{tpu_custom_call.1} parent=1 // pred_region
      %s387 = ssub.s32 256, 256
      %388 = vsyncadd [#allocation3], %s387
      %s389 = sshll.u32 [#allocation2], 4
      %s390 = int_to_ptr.vmem [resolvable:$true] %s389
      %395 = dma.vmem_to_hbm [thread:$0]  %s390, 256, %s9, [#allocation3], 128, 128, 8
    $region41: #{tpu_custom_call.1} parent=1 // pred_fallthru
      _
    // Predicated region
    $region42: #{tpu_custom_call.1} parent=1 // pred_check
      _
    $region43: #{tpu_custom_call.1} parent=1 // pred_check_branch
      %397 = sbr.rel (0) target = $region45
    $region44: #{tpu_custom_call.1} parent=1 // pred_region
      %398 = dma.done [#allocation3], 256
    $region45: #{tpu_custom_call.1} parent=1 // pred_fallthru
      _
    %399 = vsyncpa [#allocation3], 1

</llo_original>
